<compile_context>
chip_gen: v5e
topology: v5e:2x2
jax: 0.10.0
libtpu: 0.0.40
codegen_flags: <defaults>
</compile_context>

<pallas_src>
import jax
import jax.numpy as jnp
from jax import lax
from jax.experimental import pallas as pl
from jax.experimental.pallas import tpu as pltpu


def _mlp_kernel(x_ref, w1_ref, b1_ref, w2_ref, b2_ref, w3_ref, b3_ref, o_ref):
    # x tile in its native (TB, D_in) layout.  Cast (if any) happens here, after
    # the HBM read, so the wrapper never adds an extra astype pass over x.
    x = x_ref[...].astype(w1_ref.dtype)

    # fc1 + ReLU : contract D_in of w1 (H, D_in) with D_in of x (TB, D_in) -> (H, TB).
    # Lanes-as-batch activation layout produced directly, no transpose anywhere.
    h1 = lax.dot_general(w1_ref[...], x,
                         dimension_numbers=(((1,), (1,)), ((), ())),
                         preferred_element_type=jnp.float32)
    h1 = jnp.maximum(h1 + b1_ref[...], 0.0)          # bias + ReLU in f32 (VPU)
    # dropout(p=0.2) -> identity at inference

    # fc2 + ReLU : (H2, H) @ (H, TB) -> (H2, TB), f32 accumulation on the MXU.
    h2 = jnp.dot(w2_ref[...], h1.astype(w2_ref.dtype),
                 preferred_element_type=jnp.float32)
    h2 = jnp.maximum(h2 + b2_ref[...], 0.0)
    # dropout(p=0.2) -> identity at inference

    # fc3 : (1, H2) @ (H2, TB) -> (1, TB)   lane-dense output row.
    out = jnp.dot(w3_ref[...], h2.astype(w3_ref.dtype),
                  preferred_element_type=jnp.float32)
    o_ref[...] = (out + b3_ref[...]).astype(o_ref.dtype)


def _round_up(n, m):
    return ((n + m - 1) // m) * m


def neural_seasonal_forward(x, params, *, compute_dtype=jnp.float32,
                            max_tile_b=16384, vmem_limit_bytes=None):
    """x: (B, input_size). params: PyTorch-layout weights (out, in), biases (out, 1).

    Returns (B, 1) float32, matching NeuralSeasonalLayer.forward (inference mode).
    """
    B, d_in = x.shape
    w1 = params["w1"].astype(compute_dtype)     # (H,  D_in)   tiny -> cheap to cast
    w2 = params["w2"].astype(compute_dtype)     # (H2, H)
    w3 = params["w3"].astype(compute_dtype)     # (1,  H2)
    b1, b2, b3 = params["b1"], params["b2"], params["b3"]   # (out, 1), kept f32

    H, H2 = w1.shape[0], w2.shape[0]

    # Batch (row/lane) tile.
    #  * tiny batch: single full-extent tile (sidesteps the (8,128) rule).
    #  * otherwise: 128-multiple tile, capped at max_tile_b, and chosen so the
    #    grid has >= 2 steps when possible (keeps both v7x TensorCores busy via
    #    the "parallel" axis; a no-op on single-TC v5e/v6e).
    if B <= 128:
        TB = B
    else:
        TB = min(max_tile_b, _round_up(pl.cdiv(B, 2), 128))
    grid = (pl.cdiv(B, TB),)

    resident = lambda a: pl.BlockSpec(a.shape, lambda j: (0, 0))  # stays in VMEM

    flops = 2 * B * (d_in * H + H * H2 + H2)
    bytes_accessed = (
        x.size * x.dtype.itemsize + B * 4
        + w1.size * w1.dtype.itemsize + w2.size * w2.dtype.itemsize
        + w3.size * w3.dtype.itemsize
        + b1.size * 4 + b2.size * 4 + b3.size * 4
    )

    cp_kwargs = dict(dimension_semantics=("parallel",))
    if vmem_limit_bytes is not None:
        cp_kwargs["vmem_limit_bytes"] = int(vmem_limit_bytes)

    outT = pl.pallas_call(
        _mlp_kernel,
        out_shape=jax.ShapeDtypeStruct((1, B), jnp.float32),
        grid=grid,
        in_specs=[
            # Native-layout x tile, double-buffered by the pipeline.
            # (If the x DMA is still exposed after the tile-size sweep, add
            #  pipeline_mode=pl.Buffered(3) here — the x tile is cheap in VMEM.)
            pl.BlockSpec((TB, d_in), lambda j: (j, 0)),
            resident(w1), resident(b1),
            resident(w2), resident(b2),
            resident(w3), resident(b3),
        ],
        out_specs=pl.BlockSpec((1, TB), lambda j: (0, j)),
        compiler_params=pltpu.CompilerParams(**cp_kwargs),
        cost_estimate=pl.CostEstimate(flops=flops, transcendentals=0,
                                      bytes_accessed=int(bytes_accessed)),
    )(x, w1, b1, w2, b2, w3, b3)

    # (1, B) -> (B, 1) is a free reshape (row-major order unchanged), not a transpose.
    return outT.reshape(B, 1)


def init_params(key, input_size, hidden_size=64):
    """nn.Linear-style init. Weights in PyTorch (out, in) layout, biases as (out, 1)."""
    h2 = hidden_size // 2
    ks = jax.random.split(key, 6)

    def lin(kw, kb, fan_in, fan_out):
        bound = 1.0 / jnp.sqrt(float(fan_in))
        w = jax.random.uniform(kw, (fan_out, fan_in), jnp.float32, -bound, bound)
        b = jax.random.uniform(kb, (fan_out, 1), jnp.float32, -bound, bound)
        return w, b

    w1, b1 = lin(ks[0], ks[1], input_size, hidden_size)
    w2, b2 = lin(ks[2], ks[3], hidden_size, h2)
    w3, b3 = lin(ks[4], ks[5], h2, 1)
    return {"w1": w1, "b1": b1, "w2": w2, "b2": b2, "w3": w3, "b3": b3}


def _reference(x, p):
    h1 = jnp.maximum(x @ p["w1"].T + p["b1"].T, 0.0)
    h2 = jnp.maximum(h1 @ p["w2"].T + p["b2"].T, 0.0)
    return h2 @ p["w3"].T + p["b3"].T


if __name__ == "__main__":
    key = jax.random.PRNGKey(0)
    k_x, k_p, k_x2 = jax.random.split(key, 3)

    batch, input_size, hidden_size = 8, 16, 32
    x = jax.random.normal(k_x, (batch, input_size), jnp.float32)
    params = init_params(k_p, input_size, hidden_size)
    ref = _reference(x, params)

    # f32 path, single full-extent tile — bit-for-bit comparable to the reference.
    out = jax.block_until_ready(neural_seasonal_forward(x, params))
    assert out.shape == (batch, 1), out.shape
    assert jnp.allclose(out, ref, atol=1e-5, rtol=1e-5), "f32 mismatch vs reference"

    # Multi-step grid with a partial last tile (exercises the tiled/parallel path).
    big_batch = 300
    x_big = jax.random.normal(k_x2, (big_batch, input_size), jnp.float32)
    ref_big = _reference(x_big, params)
    out_big = jax.block_until_ready(neural_seasonal_forward(x_big, params))
    assert out_big.shape == (big_batch, 1), out_big.shape
    assert jnp.allclose(out_big, ref_big, atol=1e-5, rtol=1e-5), "tiled f32 mismatch"

    # bf16 weights / in-kernel x cast; f32 accumulation and f32 bias/ReLU.
    out_bf16 = jax.block_until_ready(
        neural_seasonal_forward(x, params, compute_dtype=jnp.bfloat16))
    assert out_bf16.shape == (batch, 1), out_bf16.shape
    assert jnp.allclose(out_bf16, ref, atol=5e-2, rtol=5e-2), "bf16 mismatch vs reference"

    print("KERNEL_OK")
</pallas_src>

<mosaic_0001>
module attributes {stable_mosaic.version = 11 : i64} {
  func.func @_mlp_kernel(%arg0: i32, %arg1: memref<8x16xf32, #tpu.memory_space<vmem>>, %arg2: memref<32x16xf32, #tpu.memory_space<vmem>>, %arg3: memref<32x1xf32, #tpu.memory_space<vmem>>, %arg4: memref<16x32xf32, #tpu.memory_space<vmem>>, %arg5: memref<16x1xf32, #tpu.memory_space<vmem>>, %arg6: memref<1x16xf32, #tpu.memory_space<vmem>>, %arg7: memref<1x1xf32, #tpu.memory_space<vmem>>, %arg8: memref<1x8xf32, #tpu.memory_space<vmem>>) attributes {dimension_semantics = [#tpu.dimension_semantics<parallel>], iteration_bounds = array<i64: 1>, scalar_prefetch = 0 : i64, scratch_operands = 0 : i64, tpu.core_type = #tpu.core_type<tc>, window_params = [{transform_indices = @transform_0, window_bounds = array<i64: 8, 16>}, {pipeline_mode = #tpu.pipeline_mode<synchronous>, transform_indices = @transform_1, window_bounds = array<i64: 32, 16>}, {pipeline_mode = #tpu.pipeline_mode<synchronous>, transform_indices = @transform_2, window_bounds = array<i64: 32, 1>}, {pipeline_mode = #tpu.pipeline_mode<synchronous>, transform_indices = @transform_3, window_bounds = array<i64: 16, 32>}, {pipeline_mode = #tpu.pipeline_mode<synchronous>, transform_indices = @transform_4, window_bounds = array<i64: 16, 1>}, {pipeline_mode = #tpu.pipeline_mode<synchronous>, transform_indices = @transform_5, window_bounds = array<i64: 1, 16>}, {pipeline_mode = #tpu.pipeline_mode<synchronous>, transform_indices = @transform_6, window_bounds = array<i64: 1, 1>}, {transform_indices = @transform_7, window_bounds = array<i64: 1, 8>}]} {
    %c0 = arith.constant 0 : index
    %c0_0 = arith.constant 0 : index
    %0 = vector.load %arg1[%c0, %c0_0] : memref<8x16xf32, #tpu.memory_space<vmem>>, vector<8x16xf32>
    %c0_1 = arith.constant 0 : index
    %c0_2 = arith.constant 0 : index
    %1 = vector.load %arg2[%c0_1, %c0_2] : memref<32x16xf32, #tpu.memory_space<vmem>>, vector<32x16xf32>
    %cst = arith.constant dense<0.000000e+00> : vector<32x8xf32>
    %2 = tpu.matmul %1, %0, %cst {dimension_numbers = #tpu.dot_dimension_numbers<[1], [1], [0], [0], [0, 0, 1, 0], [], []>} : vector<32x16xf32>, vector<8x16xf32>, vector<32x8xf32> -> vector<32x8xf32>
    %c0_3 = arith.constant 0 : index
    %c0_4 = arith.constant 0 : index
    %3 = vector.load %arg3[%c0_3, %c0_4] : memref<32x1xf32, #tpu.memory_space<vmem>>, vector<32x1xf32>
    %4 = vector.broadcast %3 : vector<32x1xf32> to vector<32x8xf32>
    %5 = arith.addf %2, %4 : vector<32x8xf32>
    %cst_5 = arith.constant 0.000000e+00 : f32
    %6 = vector.broadcast %cst_5 : f32 to vector<32x8xf32>
    %7 = arith.maximumf %5, %6 : vector<32x8xf32>
    %c0_6 = arith.constant 0 : index
    %c0_7 = arith.constant 0 : index
    %8 = vector.load %arg4[%c0_6, %c0_7] : memref<16x32xf32, #tpu.memory_space<vmem>>, vector<16x32xf32>
    %cst_8 = arith.constant dense<0.000000e+00> : vector<16x8xf32>
    %9 = tpu.matmul %8, %7, %cst_8 {dimension_numbers = #tpu.dot_dimension_numbers<[1], [0], [0], [1], [0, 0, 1, 1], [], []>} : vector<16x32xf32>, vector<32x8xf32>, vector<16x8xf32> -> vector<16x8xf32>
    %c0_9 = arith.constant 0 : index
    %c0_10 = arith.constant 0 : index
    %10 = vector.load %arg5[%c0_9, %c0_10] : memref<16x1xf32, #tpu.memory_space<vmem>>, vector<16x1xf32>
    %11 = vector.broadcast %10 : vector<16x1xf32> to vector<16x8xf32>
    %12 = arith.addf %9, %11 : vector<16x8xf32>
    %cst_11 = arith.constant 0.000000e+00 : f32
    %13 = vector.broadcast %cst_11 : f32 to vector<16x8xf32>
    %14 = arith.maximumf %12, %13 : vector<16x8xf32>
    %c0_12 = arith.constant 0 : index
    %c0_13 = arith.constant 0 : index
    %15 = vector.load %arg6[%c0_12, %c0_13] : memref<1x16xf32, #tpu.memory_space<vmem>>, vector<1x16xf32>
    %cst_14 = arith.constant dense<0.000000e+00> : vector<1x8xf32>
    %16 = tpu.matmul %15, %14, %cst_14 {dimension_numbers = #tpu.dot_dimension_numbers<[1], [0], [0], [1], [0, 0, 1, 1], [], []>} : vector<1x16xf32>, vector<16x8xf32>, vector<1x8xf32> -> vector<1x8xf32>
    %c0_15 = arith.constant 0 : index
    %c0_16 = arith.constant 0 : index
    %17 = vector.load %arg7[%c0_15, %c0_16] : memref<1x1xf32, #tpu.memory_space<vmem>>, vector<1x1xf32>
    %18 = vector.broadcast %17 : vector<1x1xf32> to vector<1x8xf32>
    %19 = arith.addf %16, %18 : vector<1x8xf32>
    %c0_17 = arith.constant 0 : index
    %c0_18 = arith.constant 0 : index
    %20 = vector.load %arg8[%c0_17, %c0_18] : memref<1x8xf32, #tpu.memory_space<vmem>>, vector<1x8xf32>
    tpu.vector_store %arg8[%c0_17, %c0_18], %19 {strides = array<i32>} : memref<1x8xf32, #tpu.memory_space<vmem>>, vector<1x8xf32>,
    return
  }
  func.func @transform_0(%arg0: i32) -> (i32, i32) {
    %c0_i32 = arith.constant 0 : i32
    %c0_i32_0 = arith.constant 0 : i32
    return %arg0, %c0_i32 : i32, i32
  }
  func.func @transform_1(%arg0: i32) -> (i32, i32) {
    %c0_i32 = arith.constant 0 : i32
    %c0_i32_0 = arith.constant 0 : i32
    %c0_i32_1 = arith.constant 0 : i32
    return %c0_i32, %c0_i32_0 : i32, i32
  }
  func.func @transform_2(%arg0: i32) -> (i32, i32) {
    %c0_i32 = arith.constant 0 : i32
    %c0_i32_0 = arith.constant 0 : i32
    %c0_i32_1 = arith.constant 0 : i32
    return %c0_i32, %c0_i32_0 : i32, i32
  }
  func.func @transform_3(%arg0: i32) -> (i32, i32) {
    %c0_i32 = arith.constant 0 : i32
    %c0_i32_0 = arith.constant 0 : i32
    %c0_i32_1 = arith.constant 0 : i32
    return %c0_i32, %c0_i32_0 : i32, i32
  }
  func.func @transform_4(%arg0: i32) -> (i32, i32) {
    %c0_i32 = arith.constant 0 : i32
    %c0_i32_0 = arith.constant 0 : i32
    %c0_i32_1 = arith.constant 0 : i32
    return %c0_i32, %c0_i32_0 : i32, i32
  }
  func.func @transform_5(%arg0: i32) -> (i32, i32) {
    %c0_i32 = arith.constant 0 : i32
    %c0_i32_0 = arith.constant 0 : i32
    %c0_i32_1 = arith.constant 0 : i32
    return %c0_i32, %c0_i32_0 : i32, i32
  }
  func.func @transform_6(%arg0: i32) -> (i32, i32) {
    %c0_i32 = arith.constant 0 : i32
    %c0_i32_0 = arith.constant 0 : i32
    %c0_i32_1 = arith.constant 0 : i32
    return %c0_i32, %c0_i32_0 : i32, i32
  }
  func.func @transform_7(%arg0: i32) -> (i32, i32) {
    %c0_i32 = arith.constant 0 : i32
    %c0_i32_0 = arith.constant 0 : i32
    return %c0_i32, %arg0 : i32, i32
  }
}

</mosaic_0001>

<llo_original>
// kernel: tpu_custom_call.1
$region0: #{tpu_custom_call.1}
  #allocation0 [shape = 'u32[]', space=smem, size = 0x4, offset = 0x4, fixed_abs, tag = 'smem constant byte address 0x4 - core index']
  #allocation1 [shape = 'u32[72,128]{1,0:T(1,128)}', space=vmem, size = 0x9000, scoped, tag = 'internal scratch']
  #allocation2 [shape = 'f32[1,1]{1,0:T(1,128)S(1)}', space=vmem, size = 0x200, scoped, tag = 'scoped memory for tpu_custom_call.1']
  %s0 = inlined_call_operand.vmem [shape: f32[8,16], index: 0, kind: input, shape index: {}]
  %s1 = inlined_call_operand.vmem [shape: f32[32,16], index: 1, kind: input, shape index: {}]
  %s2 = inlined_call_operand.vmem [shape: f32[32,1], index: 2, kind: input, shape index: {}]
  %s3 = inlined_call_operand.vmem [shape: f32[16,32], index: 3, kind: input, shape index: {}]
  %s4 = inlined_call_operand.vmem [shape: f32[16,1], index: 4, kind: input, shape index: {}]
  %s5 = inlined_call_operand.vmem [shape: f32[1,16], index: 5, kind: input, shape index: {}]
  %s6 = inlined_call_operand.<no memory space> [shape: f32[1,1], index: 6, kind: input, shape index: {}]
  %s7 = inlined_call_operand.hbm [shape: f32[1,8], index: 7, kind: output, shape index: {}]
  %s8 = sld [smem:[#allocation0]]
  $region38: #{tpu_custom_call.1} parent=0
    _
  %s10 = ssub.s32 1, %s8
  %s11 = scalar_select 0, %s10, %s8
  %v12 = vstv %s6
  %13 = vst [vmem:[#allocation2] sm:$0x1] %v12
  $region1: #{tpu_custom_call.1} parent=0
    #allocation3 [shape = 'u8[512]{0}', space=vmem, size = 0x400, scoped, tag = 'output window, operand 0, single buffered']
    #allocation4 [shape = 's32[1]{0}', space=sflag, size = 0x4, scoped, tag = 'scoped memory for tpu_custom_call.1']
    %14 = vsyncpa [#allocation4], 0
    // Predicated region
    $region2: #{tpu_custom_call.1} parent=1 // pred_check
      _
    $region3: #{tpu_custom_call.1} parent=1 // pred_check_branch
      %16 = sbr.rel (0) target = $region5
    $region4: #{tpu_custom_call.1} parent=1 // pred_region
      _
    $region5: #{tpu_custom_call.1} parent=1 // pred_fallthru
      _
    // Predicated region
    $region6: #{tpu_custom_call.1} parent=1 // pred_check
      _
    $region7: #{tpu_custom_call.1} parent=1 // pred_check_branch
      %18 = sbr.rel (0) target = $region9
    $region8: #{tpu_custom_call.1} parent=1 // pred_region
      _
    $region9: #{tpu_custom_call.1} parent=1 // pred_fallthru
      _
    // Predicated region
    $region10: #{tpu_custom_call.1} parent=1 // pred_check
      _
    $region11: #{tpu_custom_call.1} parent=1 // pred_check_branch
      %20 = sbr.rel (0) target = $region13
    $region12: #{tpu_custom_call.1} parent=1 // pred_region
      _
    $region13: #{tpu_custom_call.1} parent=1 // pred_fallthru
      _
    // Predicated region
    $region14: #{tpu_custom_call.1} parent=1 // pred_check
      _
    $region15: #{tpu_custom_call.1} parent=1 // pred_check_branch
      %22 = sbr.rel (0) target = $region17
    $region16: #{tpu_custom_call.1} parent=1 // pred_region
      _
    $region17: #{tpu_custom_call.1} parent=1 // pred_fallthru
      _
    // Predicated region
    $region18: #{tpu_custom_call.1} parent=1 // pred_check
      _
    $region19: #{tpu_custom_call.1} parent=1 // pred_check_branch
      %24 = sbr.rel (0) target = $region21
    $region20: #{tpu_custom_call.1} parent=1 // pred_region
      _
    $region21: #{tpu_custom_call.1} parent=1 // pred_fallthru
      _
    // Predicated region
    $region22: #{tpu_custom_call.1} parent=1 // pred_check
      _
    $region23: #{tpu_custom_call.1} parent=1 // pred_check_branch
      %26 = sbr.rel (0) target = $region25
    $region24: #{tpu_custom_call.1} parent=1 // pred_region
      _
    $region25: #{tpu_custom_call.1} parent=1 // pred_fallthru
      _
    // Predicated region
    $region26: #{tpu_custom_call.1} parent=1 // pred_check
      _
    $region27: #{tpu_custom_call.1} parent=1 // pred_check_branch
      %28 = sbr.rel (0) target = $region29
    $region28: #{tpu_custom_call.1} parent=1 // pred_region
      _
    $region29: #{tpu_custom_call.1} parent=1 // pred_fallthru
      _
    %v29 = vld [vmem:[%s0] sm:$0xff]
    %v30 = vld [vmem:[%s1] sm:$0xff]
    %v31 = vld [vmem:[%s1 + $0x8] sm:$0xff]
    %v32 = vld [vmem:[%s1 + $0x10] sm:$0xff]
    %v33 = vld [vmem:[%s1 + $0x18] sm:$0xff]
    %v34 = vld [vmem:[%s2] sm:$0xff]
    %v35 = vld [vmem:[%s2 + $0x8] sm:$0xff]
    %v36 = vld [vmem:[%s2 + $0x10] sm:$0xff]
    %v37 = vld [vmem:[%s2 + $0x18] sm:$0xff]
    %39 = vset.pattern.permute.xlu0 0
    %40 = vperm.xlu0 %39, %v34
    %v41 = vpop.permute.xlu0 %40
    %44 = vset.pattern.permute.xlu0 0
    %45 = vperm.xlu0 %44, %v35
    %v46 = vpop.permute.xlu0 %45
    %49 = vset.pattern.permute.xlu0 0
    %50 = vperm.xlu0 %49, %v36
    %v51 = vpop.permute.xlu0 %50
    %54 = vset.pattern.permute.xlu0 0
    %55 = vperm.xlu0 %54, %v37
    %v56 = vpop.permute.xlu0 %55
    %vm58 = vcmask 130048
    %v60 = vsel %vm58, %v30, 0
    %v63 = vsel %vm58, %v31, 0
    %v66 = vsel %vm58, %v32, 0
    %v69 = vsel %vm58, %v33, 0
    %v72 = vsel %vm58, %v29, 0
    %74 = vmatpush.xpose.msra.mxu0 0.0
    %75 = vmatpush.xpose.msra.mxu0 0.0
    %76 = vmatpush.xpose.msra.mxu0 0.0
    %77 = vmatpush.xpose.msra.mxu0 0.0
    %78 = vmatpush.xpose.msra.mxu0 0.0
    %79 = vmatpush.xpose.msra.mxu0 0.0
    %80 = vmatpush.xpose.msra.mxu0 0.0
    %81 = vmatpush.xpose.msra.mxu0 0.0
    %82 = vmatpush.xpose.msra.mxu0 0.0
    %83 = vmatpush.xpose.msra.mxu0 0.0
    %84 = vmatpush.xpose.msra.mxu0 0.0
    %85 = vmatpush.xpose.msra.mxu0 0.0
    %86 = vmatpush.xpose.msra.mxu0 0.0
    %87 = vmatpush.xpose.msra.mxu0 0.0
    %88 = vmatpush.xpose.msra.mxu0 0.0
    %89 = vmatpush.xpose.msra.mxu0 %v72
    %90 = vmatmul.f32.gmra.mxu0 %v60
    %v91 = vpop.f32.mrf.mxu0
    %v92 = vadd.f32 %v41, %v91
    %93 = vmatmul.f32.gmra.mxu0 %v63
    %v94 = vpop.f32.mrf.mxu0
    %v95 = vadd.f32 %v46, %v94
    %96 = vmatmul.f32.gmra.mxu0 %v66
    %v97 = vpop.f32.mrf.mxu0
    %v98 = vadd.f32 %v51, %v97
    %99 = vmatmul.f32.gmra.mxu0 %v69
    %v100 = vpop.f32.mrf.mxu0
    %v101 = vadd.f32 %v56, %v100
    %102 = vdwg.mxu0
    %v103 = vmax.f32 %v92, 0.0
    %v104 = vmax.f32 %v95, 0.0
    %v105 = vmax.f32 %v98, 0.0
    %v106 = vmax.f32 %v101, 0.0
    %v107 = vld [vmem:[%s3] sm:$0xff]
    %v108 = vld [vmem:[%s3 + $0x8] sm:$0xff]
    %v109 = vld [vmem:[%s4] sm:$0xff]
    %v110 = vld [vmem:[%s4 + $0x8] sm:$0xff]
    %112 = vset.pattern.permute.xlu0 0
    %113 = vperm.xlu0 %112, %v109
    %v114 = vpop.permute.xlu0 %113
    %117 = vset.pattern.permute.xlu0 0
    %118 = vperm.xlu0 %117, %v110
    %v119 = vpop.permute.xlu0 %118
    %vm121 = vcmask 261120
    %v123 = vsel %vm121, %v107, 0
    %v126 = vsel %vm121, %v108, 0
    %128 = vmatpush.msra.mxu0 0.0
    %129 = vmatpush.msra.mxu0 0.0
    %130 = vmatpush.msra.mxu0 0.0
    %131 = vmatpush.msra.mxu0 0.0
    %132 = vmatpush.msra.mxu0 0.0
    %133 = vmatpush.msra.mxu0 0.0
    %134 = vmatpush.msra.mxu0 0.0
    %135 = vmatpush.msra.mxu0 0.0
    %136 = vmatpush.msra.mxu0 0.0
    %137 = vmatpush.msra.mxu0 0.0
    %138 = vmatpush.msra.mxu0 0.0
    %139 = vmatpush.msra.mxu0 0.0
    %140 = vmatpush.msra.mxu0 %v106
    %141 = vmatpush.msra.mxu0 %v105
    %142 = vmatpush.msra.mxu0 %v104
    %143 = vmatpush.msra.mxu0 %v103
    %144 = vmatmul.f32.gmra.mxu0 %v123
    %v145 = vpop.f32.mrf.mxu0
    %v146 = vadd.f32 %v114, %v145
    %147 = vmatmul.f32.gmra.mxu0 %v126
    %v148 = vpop.f32.mrf.mxu0
    %v149 = vadd.f32 %v119, %v148
    %150 = vdwg.mxu0
    %v151 = vmax.f32 %v146, 0.0
    %v152 = vmax.f32 %v149, 0.0
    %v153 = vld [vmem:[%s5] sm:$0x1]
    %v154 = vld [vmem:[#allocation2] sm:$0x1]
    %156 = vset.pattern.permute.xlu0 0
    %157 = vperm.xlu0 %156, %v154
    %v158 = vpop.permute.xlu0 %157
    %v160 = vperm.slane %v158, 0
    %v162 = vsel %vm58, %v153, 0
    %164 = vmatpush.msra.mxu0 0.0
    %165 = vmatpush.msra.mxu0 0.0
    %166 = vmatpush.msra.mxu0 0.0
    %167 = vmatpush.msra.mxu0 0.0
    %168 = vmatpush.msra.mxu0 0.0
    %169 = vmatpush.msra.mxu0 0.0
    %170 = vmatpush.msra.mxu0 0.0
    %171 = vmatpush.msra.mxu0 0.0
    %172 = vmatpush.msra.mxu0 0.0
    %173 = vmatpush.msra.mxu0 0.0
    %174 = vmatpush.msra.mxu0 0.0
    %175 = vmatpush.msra.mxu0 0.0
    %176 = vmatpush.msra.mxu0 0.0
    %177 = vmatpush.msra.mxu0 0.0
    %178 = vmatpush.msra.mxu0 %v152
    %179 = vmatpush.msra.mxu0 %v151
    %180 = vmatmul.f32.gmra.mxu0 %v162
    %v181 = vpop.f32.mrf.mxu0
    %v182 = vadd.f32 %v160, %v181
    %183 = vdwg.mxu0
    %vm184 = vcmask 57344
    %185 = vst.msk [vmem:[#allocation3] sm:$0x1] %vm184, %v182
    // Predicated region
    $region30: #{tpu_custom_call.1} parent=1 // pred_check
      _
    $region31: #{tpu_custom_call.1} parent=1 // pred_check_branch
      %187 = sbr.rel (0) target = $region33
    $region32: #{tpu_custom_call.1} parent=1 // pred_region
      %189 = vsyncadd [#allocation4], 0
      %s191 = sshll.u32 [#allocation3], 4
      %s192 = int_to_ptr.vmem [resolvable:$true] %s191
      %s193 = sshll.u32 %s7, 4
      %s194 = int_to_ptr.hbm [resolvable:$true] %s193
      %196 = dma.vmem_to_hbm [thread:$0]  %s192, 16, %s194, [#allocation4]
    $region33: #{tpu_custom_call.1} parent=1 // pred_fallthru
      _
    // Predicated region
    $region34: #{tpu_custom_call.1} parent=1 // pred_check
      _
    $region35: #{tpu_custom_call.1} parent=1 // pred_check_branch
      %198 = sbr.rel (0) target = $region37
    $region36: #{tpu_custom_call.1} parent=1 // pred_region
      %200 = dma.done [#allocation4], 16
    $region37: #{tpu_custom_call.1} parent=1 // pred_fallthru
      _
    %201 = vsyncpa [#allocation4], 1

</llo_original>
